<compile_context>
chip_gen: v6e
topology: v6e:2x2x1
jax: 0.10.0
libtpu: 0.0.40
codegen_flags: <defaults>
</compile_context>

<pallas_src>
import functools

import jax
import jax.numpy as jnp
import numpy as np
from jax import lax
from jax.experimental import pallas as pl
from jax.experimental.pallas import tpu as pltpu

NUM_CLASSES = 51
FEAT_DIM = 128            # small stand-in for the module's feat_dim=1024
NUM_CENTER_HEAD_CLS = 15  # stand-in for cfg.MODEL.num_center_head_cls
PRED_FRE = [0, 31, 20, 48, 30, 22, 29, 8, 50, 21, 1, 43, 49, 40, 23, 38, 41,
            6, 7, 33, 11, 46, 16, 47, 25, 19, 5, 9, 35, 24, 10, 4, 14, 13,
            12, 36, 44, 42, 32, 2, 26, 28, 45, 3, 17, 18, 34, 37, 27, 39, 15]

C_PAD = 128               # lane-dense padded class axis


def _round_up(v, m):
    return ((v + m - 1) // m) * m


def _center_loss_kernel(labels_ref, x_ref, centers_t_ref, params_ref, out_ref,
                        *, n_rows):
    """Accumulates masked sums into the resident (8,128) output tile and, on
    the last grid step, writes the two final losses into row 0 lanes 0/1.

    Accumulator layout: row 0 lane 0 = sum(clamped fg dist), row 0 lane 1 =
    sum(clamped head dist), row 1 lanes 0..1 = foreground count.
    """
    i = pl.program_id(0)
    tn = labels_ref.shape[0]
    c_pad = centers_t_ref.shape[1]

    @pl.when(i == 0)
    def _init():
        out_ref[...] = jnp.zeros_like(out_ref)

    labels = labels_ref[...]                             # [tn, 1] int32
    x = x_ref[...].astype(jnp.float32)                   # [tn, D]  f32

    # Valid-row (last block may be partial -> garbage rows) + foreground mask.
    row = i * tn + lax.broadcasted_iota(jnp.int32, (tn, 1), 0)
    fg_mask = (row < n_rows) & (labels != 0)             # [tn, 1] bool

    # x @ centers^T : K = D contraction on the MXU; HIGHEST keeps f32 accuracy
    # (the ||x||^2 - 2 x.c + ||c||^2 expansion is cancellation-sensitive).
    xc = jnp.dot(x, centers_t_ref[...],
                 preferred_element_type=jnp.float32,
                 precision=lax.Precision.HIGHEST)        # [tn, C_PAD]

    # One-hot of the label (exact 0/1) used to pick the label column and to
    # derive the head flag — no per-row gather stream needed.
    onehot = (labels == lax.broadcasted_iota(jnp.int32, (tn, c_pad), 1)
              ).astype(jnp.float32)                      # [tn, C_PAD]

    csq_row = params_ref[0:1, :]                         # [1, C_PAD]  ||c||^2
    head_row = params_ref[1:2, :]                        # [1, C_PAD]  head flag

    x_sq = jnp.sum(x * x, axis=-1, keepdims=True)        # [tn, 1]
    picked = jnp.sum(onehot * (csq_row - 2.0 * xc),
                     axis=-1, keepdims=True)             # [tn, 1]
    dist = x_sq + picked                                 # [tn, 1] squared dist
    head = jnp.sum(onehot * head_row, axis=-1, keepdims=True)   # [tn, 1] 0/1

    # Masked contributions (jnp.where, not multiply, so garbage rows of a
    # partial last block cannot inject NaN/Inf into the sums).
    cu = jnp.where(fg_mask, jnp.clip(dist, 1e-8, 1e8), 0.0)
    hd = jnp.where(fg_mask, jnp.clip(dist * head, 1e-8, 1e8), 0.0)
    fg = jnp.where(fg_mask, 1.0, 0.0)

    cu_s = jnp.sum(cu, keepdims=True)                    # [1, 1]
    hd_s = jnp.sum(hd, keepdims=True)                    # [1, 1]
    fg_s = jnp.sum(fg, keepdims=True)                    # [1, 1]

    sub = lax.broadcasted_iota(jnp.int32, (8, 128), 0)
    lane = lax.broadcasted_iota(jnp.int32, (8, 128), 1)
    contrib = (jnp.where((sub == 0) & (lane == 0), cu_s, 0.0)
               + jnp.where((sub == 0) & (lane == 1), hd_s, 0.0)
               + jnp.where((sub == 1) & (lane < 2), fg_s, 0.0))
    out_ref[...] += contrib

    # Fused epilogue: mean + (empty -> NaN -> 0) handling on the last step.
    @pl.when(i == pl.num_programs(0) - 1)
    def _finalize():
        acc = out_ref[...]
        num = acc[0:1, :]                                # sums
        den = acc[1:2, :]                                # fg count (lanes 0,1)
        res = jnp.where(den > 0.0, num / den, 0.0)       # 0 fg rows -> 0
        out_ref[...] = jnp.where(sub == 0, res, 0.0)


@functools.partial(jax.jit, static_argnames=("max_tn",))
def center_loss_forward(x, cut_labels, logits, labels, centers, head_flag,
                        *, max_tn=512):
    """Returns (center_update, head_ct_loss) exactly like CenterLoss.forward.

    logits / labels are accepted for signature parity but unused (as in the
    PyTorch forward).  head_flag is a length-C 0/1 vector marking head
    predicates.
    """
    del logits, labels
    n, d = x.shape
    c = centers.shape[0]
    assert c <= C_PAD

    if n == 0:  # torch: empty mean -> NaN -> 0
        z = jnp.zeros((), jnp.float32)
        return z, z

    # Resident parameters: centers^T padded to a lane-dense class axis, plus a
    # [2, C_PAD] tile with ||c||^2 (row 0) and the head flag (row 1).
    centers_f32 = centers.astype(jnp.float32)
    centers_t = jnp.pad(centers_f32.T, ((0, 0), (0, C_PAD - c)))
    c_sq = jnp.pad(jnp.sum(centers_f32 * centers_f32, axis=-1), (0, C_PAD - c))
    head_row = jnp.pad(head_flag.reshape(-1).astype(jnp.float32),
                       (0, C_PAD - c))
    params = jnp.stack([c_sq, head_row], axis=0)          # [2, C_PAD]

    # At most a 7-row pad for sublane alignment (no round-up to tn; the
    # partial last block is masked in-kernel with row < n).
    n_pad = _round_up(n, 8)
    if n_pad != n:
        x_p = jnp.pad(x, ((0, n_pad - n), (0, 0)))
        labels_p = jnp.pad(cut_labels.astype(jnp.int32), (0, n_pad - n))
    else:
        x_p = x
        labels_p = cut_labels.astype(jnp.int32)
    labels_p = labels_p.reshape(n_pad, 1)

    max_tn = max(8, _round_up(max_tn, 8))
    tn = min(max_tn, n_pad)
    num_tiles = pl.cdiv(n_pad, tn)

    flops = 2 * num_tiles * tn * d * C_PAD + 8 * num_tiles * tn * d
    bytes_accessed = (x_p.size * x_p.dtype.itemsize
                      + labels_p.size * 4
                      + centers_t.size * 4
                      + params.size * 4
                      + 8 * 128 * 4)

    kernel = functools.partial(_center_loss_kernel, n_rows=n)

    out = pl.pallas_call(
        kernel,
        out_shape=jax.ShapeDtypeStruct((8, 128), jnp.float32),
        grid_spec=pltpu.PrefetchScalarGridSpec(
            num_scalar_prefetch=0,
            grid=(num_tiles,),
            in_specs=[
                pl.BlockSpec((tn, 1), lambda i: (i, 0)),      # labels
                pl.BlockSpec((tn, d), lambda i: (i, 0)),      # x
                pl.BlockSpec((d, C_PAD), lambda i: (0, 0)),   # centers^T (resident)
                pl.BlockSpec((2, C_PAD), lambda i: (0, 0)),   # ||c||^2 + head flag
            ],
            out_specs=pl.BlockSpec((8, 128), lambda i: (0, 0)),
        ),
        # Output tile is a carried accumulator -> the row-tile axis must be
        # sequential ("arbitrary").  Fusing the mean/NaN epilogue in-kernel
        # beats sharding a microsecond-scale kernel across v7x's two cores.
        compiler_params=pltpu.CompilerParams(
            dimension_semantics=("arbitrary",)),
        cost_estimate=pl.CostEstimate(flops=flops, transcendentals=0,
                                      bytes_accessed=bytes_accessed),
    )(labels_p, x_p, centers_t, params)

    return out[0, 0], out[0, 1]


def _reference_forward(x, cut_labels, centers, head_idx):
    x = np.asarray(x, np.float32)
    cut_labels = np.asarray(cut_labels)
    centers = np.asarray(centers, np.float32)
    fg = cut_labels != 0
    xf, lf = x[fg], cut_labels[fg]
    if xf.shape[0] == 0:
        return 0.0, 0.0
    c = centers[lf]
    dist = ((xf - c) ** 2).sum(-1)
    center_update = np.clip(dist, 1e-8, 1e8).mean()
    head_mask = np.isin(lf, np.asarray(head_idx)).astype(np.float32)
    head_loss = np.clip(dist * head_mask, 1e-8, 1e8).mean()
    center_update = 0.0 if np.isnan(center_update) else center_update
    head_loss = 0.0 if np.isnan(head_loss) else head_loss
    return float(center_update), float(head_loss)


if __name__ == "__main__":
    key = jax.random.PRNGKey(0)
    k_centers, k_x, k_lab, k_logits, k_x2, k_lab2 = jax.random.split(key, 6)

    # deterministic "parameters" (nn.Parameter(torch.randn(C, D)))
    centers = jax.random.normal(k_centers, (NUM_CLASSES, FEAT_DIM),
                                dtype=jnp.float32)
    head_idx = np.array(PRED_FRE[:NUM_CENTER_HEAD_CLS], dtype=np.int32)
    head_flag = jnp.zeros((NUM_CLASSES,), jnp.float32).at[head_idx].set(1.0)

    # ---- case 1: 16 proposals, single tile -------------------------------
    N = 16
    x = jax.random.normal(k_x, (N, FEAT_DIM), dtype=jnp.float32)
    cut_labels = jax.random.randint(k_lab, (N,), 0, NUM_CLASSES,
                                    dtype=jnp.int32)
    cut_labels = cut_labels.at[0].set(0)          # ensure some background rows
    logits = jax.random.normal(k_logits, (N, NUM_CLASSES), dtype=jnp.float32)
    labels = cut_labels                            # unused by forward

    center_update, head_ct_loss = center_loss_forward(
        x, cut_labels, logits, labels, centers, head_flag)
    jax.block_until_ready((center_update, head_ct_loss))

    ref_cu, ref_hd = _reference_forward(x, cut_labels, centers, head_idx)
    np.testing.assert_allclose(float(center_update), ref_cu,
                               rtol=1e-4, atol=1e-4)
    np.testing.assert_allclose(float(head_ct_loss), ref_hd,
                               rtol=1e-4, atol=1e-4)

    # ---- case 2: 100 proposals, small tile -> multi-tile grid with a
    # partial (masked) last block --------------------------------------------
    N2 = 100
    x2 = jax.random.normal(k_x2, (N2, FEAT_DIM), dtype=jnp.float32)
    cut_labels2 = jax.random.randint(k_lab2, (N2,), 0, NUM_CLASSES,
                                     dtype=jnp.int32)
    cut_labels2 = cut_labels2.at[:3].set(0)
    logits2 = jnp.zeros((N2, NUM_CLASSES), jnp.float32)

    cu2, hd2 = center_loss_forward(x2, cut_labels2, logits2, cut_labels2,
                                   centers, head_flag, max_tn=32)
    jax.block_until_ready((cu2, hd2))

    ref_cu2, ref_hd2 = _reference_forward(x2, cut_labels2, centers, head_idx)
    np.testing.assert_allclose(float(cu2), ref_cu2, rtol=1e-4, atol=1e-4)
    np.testing.assert_allclose(float(hd2), ref_hd2, rtol=1e-4, atol=1e-4)

    print("KERNEL_OK")
</pallas_src>

<mosaic_0001>
module attributes {stable_mosaic.version = 11 : i64} {
  func.func @_center_loss_kernel(%arg0: i32, %arg1: memref<16x1xi32, #tpu.memory_space<vmem>>, %arg2: memref<16x128xf32, #tpu.memory_space<vmem>>, %arg3: memref<128x128xf32, #tpu.memory_space<vmem>>, %arg4: memref<2x128xf32, #tpu.memory_space<vmem>>, %arg5: memref<8x128xf32, #tpu.memory_space<vmem>>) attributes {dimension_semantics = [#tpu.dimension_semantics<arbitrary>], iteration_bounds = array<i64: 1>, scalar_prefetch = 0 : i64, scratch_operands = 0 : i64, tpu.core_type = #tpu.core_type<tc>, window_params = [{transform_indices = @transform_0, window_bounds = array<i64: 16, 1>}, {transform_indices = @transform_1, window_bounds = array<i64: 16, 128>}, {pipeline_mode = #tpu.pipeline_mode<synchronous>, transform_indices = @transform_2, window_bounds = array<i64: 128, 128>}, {pipeline_mode = #tpu.pipeline_mode<synchronous>, transform_indices = @transform_3, window_bounds = array<i64: 2, 128>}, {pipeline_mode = #tpu.pipeline_mode<synchronous>, transform_indices = @transform_4, window_bounds = array<i64: 8, 128>}]} {
    %c0_i32 = arith.constant 0 : i32
    %0 = arith.cmpi eq, %arg0, %c0_i32 : i32
    %1 = arith.extui %0 : i1 to i32
    %c0_i32_0 = arith.constant 0 : i32
    %2 = arith.cmpi ne, %1, %c0_i32_0 : i32
    scf.if %2 {
      %cst_39 = arith.constant 0.000000e+00 : f32
      %106 = vector.broadcast %cst_39 : f32 to vector<8x128xf32>
      %c0_40 = arith.constant 0 : index
      %c0_41 = arith.constant 0 : index
      %107 = vector.load %arg5[%c0_40, %c0_41] : memref<8x128xf32, #tpu.memory_space<vmem>>, vector<8x128xf32>
      tpu.vector_store %arg5[%c0_40, %c0_41], %106 {strides = array<i32>} : memref<8x128xf32, #tpu.memory_space<vmem>>, vector<8x128xf32>,
    } else {
    }
    %c0 = arith.constant 0 : index
    %c0_1 = arith.constant 0 : index
    %3 = vector.load %arg1[%c0, %c0_1] : memref<16x1xi32, #tpu.memory_space<vmem>>, vector<16x1xi32>
    %c0_2 = arith.constant 0 : index
    %c0_3 = arith.constant 0 : index
    %4 = vector.load %arg2[%c0_2, %c0_3] : memref<16x128xf32, #tpu.memory_space<vmem>>, vector<16x128xf32>
    %c16_i32 = arith.constant 16 : i32
    %5 = arith.muli %arg0, %c16_i32 : i32
    %6 = tpu.iota {dimensions = array<i32: 0>} : vector<16x1xi32>
    %7 = vector.broadcast %5 : i32 to vector<16x1xi32>
    %8 = arith.addi %7, %6 : vector<16x1xi32>
    %c16_i32_4 = arith.constant 16 : i32
    %9 = vector.broadcast %c16_i32_4 : i32 to vector<16x1xi32>
    %10 = arith.cmpi slt, %8, %9 : vector<16x1xi32>
    %c0_i32_5 = arith.constant 0 : i32
    %11 = vector.broadcast %c0_i32_5 : i32 to vector<16x1xi32>
    %12 = arith.cmpi ne, %3, %11 : vector<16x1xi32>
    %13 = arith.andi %10, %12 : vector<16x1xi1>
    %c0_6 = arith.constant 0 : index
    %c0_7 = arith.constant 0 : index
    %14 = vector.load %arg3[%c0_6, %c0_7] : memref<128x128xf32, #tpu.memory_space<vmem>>, vector<128x128xf32>
    %cst = arith.constant dense<0.000000e+00> : vector<16x128xf32>
    %15 = tpu.matmul %4, %14, %cst {dimension_numbers = #tpu.dot_dimension_numbers<[1], [0], [0], [1], [0, 0, 1, 1], [], []>, precision = #tpu.contract_precision<fp32>} : vector<16x128xf32>, vector<128x128xf32>, vector<16x128xf32> -> vector<16x128xf32>
    %16 = tpu.iota {dimensions = array<i32: 1>} : vector<16x128xi32>
    %17 = vector.broadcast %3 : vector<16x1xi32> to vector<16x128xi32>
    %18 = arith.cmpi eq, %17, %16 : vector<16x128xi32>
    %19 = arith.extui %18 : vector<16x128xi1> to vector<16x128xi32>
    %20 = arith.sitofp %19 : vector<16x128xi32> to vector<16x128xf32>
    %c0_8 = arith.constant 0 : index
    %c0_9 = arith.constant 0 : index
    %21 = vector.load %arg4[%c0_8, %c0_9] : memref<2x128xf32, #tpu.memory_space<vmem>>, vector<1x128xf32>
    %c1 = arith.constant 1 : index
    %c0_10 = arith.constant 0 : index
    %22 = vector.load %arg4[%c1, %c0_10] : memref<2x128xf32, #tpu.memory_space<vmem>>, vector<1x128xf32>
    %23 = arith.mulf %4, %4 : vector<16x128xf32>
    %cst_11 = arith.constant dense<0.000000e+00> : vector<16xf32>
    %24 = vector.multi_reduction <add>, %23, %cst_11 [1] : vector<16x128xf32> to vector<16xf32>
    %25 = vector.shape_cast %24 : vector<16xf32> to vector<16x1xf32>
    %cst_12 = arith.constant 2.000000e+00 : f32
    %26 = vector.broadcast %cst_12 : f32 to vector<16x128xf32>
    %27 = arith.mulf %26, %15 : vector<16x128xf32>
    %28 = vector.broadcast %21 : vector<1x128xf32> to vector<16x128xf32>
    %29 = arith.subf %28, %27 : vector<16x128xf32>
    %30 = arith.mulf %20, %29 : vector<16x128xf32>
    %cst_13 = arith.constant dense<0.000000e+00> : vector<16xf32>
    %31 = vector.multi_reduction <add>, %30, %cst_13 [1] : vector<16x128xf32> to vector<16xf32>
    %32 = vector.shape_cast %31 : vector<16xf32> to vector<16x1xf32>
    %33 = arith.addf %25, %32 : vector<16x1xf32>
    %34 = vector.broadcast %22 : vector<1x128xf32> to vector<16x128xf32>
    %35 = arith.mulf %20, %34 : vector<16x128xf32>
    %cst_14 = arith.constant dense<0.000000e+00> : vector<16xf32>
    %36 = vector.multi_reduction <add>, %35, %cst_14 [1] : vector<16x128xf32> to vector<16xf32>
    %37 = vector.shape_cast %36 : vector<16xf32> to vector<16x1xf32>
    %cst_15 = arith.constant 9.99999993E-9 : f32
    %cst_16 = arith.constant 1.000000e+08 : f32
    %38 = vector.broadcast %cst_15 : f32 to vector<16x1xf32>
    %39 = arith.maximumf %38, %33 : vector<16x1xf32>
    %40 = vector.broadcast %cst_16 : f32 to vector<16x1xf32>
    %41 = arith.minimumf %40, %39 : vector<16x1xf32>
    %cst_17 = arith.constant 0.000000e+00 : f32
    %42 = vector.broadcast %cst_17 : f32 to vector<16x1xf32>
    %43 = arith.select %13, %41, %42 : vector<16x1xi1>, vector<16x1xf32>
    %44 = arith.mulf %33, %37 : vector<16x1xf32>
    %cst_18 = arith.constant 9.99999993E-9 : f32
    %cst_19 = arith.constant 1.000000e+08 : f32
    %45 = vector.broadcast %cst_18 : f32 to vector<16x1xf32>
    %46 = arith.maximumf %45, %44 : vector<16x1xf32>
    %47 = vector.broadcast %cst_19 : f32 to vector<16x1xf32>
    %48 = arith.minimumf %47, %46 : vector<16x1xf32>
    %cst_20 = arith.constant 0.000000e+00 : f32
    %49 = vector.broadcast %cst_20 : f32 to vector<16x1xf32>
    %50 = arith.select %13, %48, %49 : vector<16x1xi1>, vector<16x1xf32>
    %cst_21 = arith.constant 1.000000e+00 : f32
    %cst_22 = arith.constant 0.000000e+00 : f32
    %51 = vector.broadcast %cst_21 : f32 to vector<16x1xf32>
    %52 = vector.broadcast %cst_22 : f32 to vector<16x1xf32>
    %53 = arith.select %13, %51, %52 : vector<16x1xi1>, vector<16x1xf32>
    %54 = vector.shape_cast %43 : vector<16x1xf32> to vector<1x16x1xf32>
    %cst_23 = arith.constant dense<0.000000e+00> : vector<1xf32>
    %55 = vector.multi_reduction <add>, %54, %cst_23 [1, 2] : vector<1x16x1xf32> to vector<1xf32>
    %56 = vector.shape_cast %55 : vector<1xf32> to vector<1x1x1xf32>
    %57 = vector.extract %56[0, 0, 0] : f32 from vector<1x1x1xf32>
    %58 = vector.broadcast %57 : f32 to vector<1x1xf32>
    %59 = vector.shape_cast %50 : vector<16x1xf32> to vector<1x16x1xf32>
    %cst_24 = arith.constant dense<0.000000e+00> : vector<1xf32>
    %60 = vector.multi_reduction <add>, %59, %cst_24 [1, 2] : vector<1x16x1xf32> to vector<1xf32>
    %61 = vector.shape_cast %60 : vector<1xf32> to vector<1x1x1xf32>
    %62 = vector.extract %61[0, 0, 0] : f32 from vector<1x1x1xf32>
    %63 = vector.broadcast %62 : f32 to vector<1x1xf32>
    %64 = vector.shape_cast %53 : vector<16x1xf32> to vector<1x16x1xf32>
    %cst_25 = arith.constant dense<0.000000e+00> : vector<1xf32>
    %65 = vector.multi_reduction <add>, %64, %cst_25 [1, 2] : vector<1x16x1xf32> to vector<1xf32>
    %66 = vector.shape_cast %65 : vector<1xf32> to vector<1x1x1xf32>
    %67 = vector.extract %66[0, 0, 0] : f32 from vector<1x1x1xf32>
    %68 = vector.broadcast %67 : f32 to vector<1x1xf32>
    %69 = tpu.iota {dimensions = array<i32: 0>} : vector<8x128xi32>
    %70 = tpu.iota {dimensions = array<i32: 1>} : vector<8x128xi32>
    %c0_i32_26 = arith.constant 0 : i32
    %71 = vector.broadcast %c0_i32_26 : i32 to vector<8x128xi32>
    %72 = arith.cmpi eq, %69, %71 : vector<8x128xi32>
    %c0_i32_27 = arith.constant 0 : i32
    %73 = vector.broadcast %c0_i32_27 : i32 to vector<8x128xi32>
    %74 = arith.cmpi eq, %70, %73 : vector<8x128xi32>
    %75 = arith.andi %72, %74 : vector<8x128xi1>
    %cst_28 = arith.constant 0.000000e+00 : f32
    %76 = vector.shape_cast %58 : vector<1x1xf32> to vector<1x1xf32>
    %77 = vector.broadcast %76 : vector<1x1xf32> to vector<8x128xf32>
    %78 = vector.broadcast %cst_28 : f32 to vector<8x128xf32>
    %79 = arith.select %75, %77, %78 : vector<8x128xi1>, vector<8x128xf32>
    %c0_i32_29 = arith.constant 0 : i32
    %80 = vector.broadcast %c0_i32_29 : i32 to vector<8x128xi32>
    %81 = arith.cmpi eq, %69, %80 : vector<8x128xi32>
    %c1_i32 = arith.constant 1 : i32
    %82 = vector.broadcast %c1_i32 : i32 to vector<8x128xi32>
    %83 = arith.cmpi eq, %70, %82 : vector<8x128xi32>
    %84 = arith.andi %81, %83 : vector<8x128xi1>
    %cst_30 = arith.constant 0.000000e+00 : f32
    %85 = vector.shape_cast %63 : vector<1x1xf32> to vector<1x1xf32>
    %86 = vector.broadcast %85 : vector<1x1xf32> to vector<8x128xf32>
    %87 = vector.broadcast %cst_30 : f32 to vector<8x128xf32>
    %88 = arith.select %84, %86, %87 : vector<8x128xi1>, vector<8x128xf32>
    %89 = arith.addf %79, %88 : vector<8x128xf32>
    %c1_i32_31 = arith.constant 1 : i32
    %90 = vector.broadcast %c1_i32_31 : i32 to vector<8x128xi32>
    %91 = arith.cmpi eq, %69, %90 : vector<8x128xi32>
    %c2_i32 = arith.constant 2 : i32
    %92 = vector.broadcast %c2_i32 : i32 to vector<8x128xi32>
    %93 = arith.cmpi slt, %70, %92 : vector<8x128xi32>
    %94 = arith.andi %91, %93 : vector<8x128xi1>
    %cst_32 = arith.constant 0.000000e+00 : f32
    %95 = vector.shape_cast %68 : vector<1x1xf32> to vector<1x1xf32>
    %96 = vector.broadcast %95 : vector<1x1xf32> to vector<8x128xf32>
    %97 = vector.broadcast %cst_32 : f32 to vector<8x128xf32>
    %98 = arith.select %94, %96, %97 : vector<8x128xi1>, vector<8x128xf32>
    %99 = arith.addf %89, %98 : vector<8x128xf32>
    %c0_33 = arith.constant 0 : index
    %c0_34 = arith.constant 0 : index
    %100 = vector.load %arg5[%c0_33, %c0_34] : memref<8x128xf32, #tpu.memory_space<vmem>>, vector<8x128xf32>
    %101 = arith.addf %100, %99 : vector<8x128xf32>
    %c0_35 = arith.constant 0 : index
    %c0_36 = arith.constant 0 : index
    %102 = vector.load %arg5[%c0_35, %c0_36] : memref<8x128xf32, #tpu.memory_space<vmem>>, vector<8x128xf32>
    tpu.vector_store %arg5[%c0_35, %c0_36], %101 {strides = array<i32>} : memref<8x128xf32, #tpu.memory_space<vmem>>, vector<8x128xf32>,
    %c0_i32_37 = arith.constant 0 : i32
    %103 = arith.cmpi eq, %arg0, %c0_i32_37 : i32
    %104 = arith.extui %103 : i1 to i32
    %c0_i32_38 = arith.constant 0 : i32
    %105 = arith.cmpi ne, %104, %c0_i32_38 : i32
    scf.if %105 {
      %c0_39 = arith.constant 0 : index
      %c0_40 = arith.constant 0 : index
      %106 = vector.load %arg5[%c0_39, %c0_40] : memref<8x128xf32, #tpu.memory_space<vmem>>, vector<8x128xf32>
      %107 = vector.extract_strided_slice %106 {offsets = [0, 0], sizes = [1, 128], strides = [1, 1]} : vector<8x128xf32> to vector<1x128xf32>
      %108 = vector.extract_strided_slice %106 {offsets = [1, 0], sizes = [1, 128], strides = [1, 1]} : vector<8x128xf32> to vector<1x128xf32>
      %cst_41 = arith.constant 0.000000e+00 : f32
      %109 = vector.broadcast %cst_41 : f32 to vector<1x128xf32>
      %110 = arith.cmpf ogt, %108, %109 : vector<1x128xf32>
      %111 = arith.divf %107, %108 : vector<1x128xf32>
      %cst_42 = arith.constant 0.000000e+00 : f32
      %112 = vector.broadcast %cst_42 : f32 to vector<1x128xf32>
      %113 = arith.select %110, %111, %112 : vector<1x128xi1>, vector<1x128xf32>
      %c0_i32_43 = arith.constant 0 : i32
      %114 = vector.broadcast %c0_i32_43 : i32 to vector<8x128xi32>
      %115 = arith.cmpi eq, %69, %114 : vector<8x128xi32>
      %cst_44 = arith.constant 0.000000e+00 : f32
      %116 = vector.shape_cast %113 : vector<1x128xf32> to vector<1x128xf32>
      %117 = vector.broadcast %116 : vector<1x128xf32> to vector<8x128xf32>
      %118 = vector.broadcast %cst_44 : f32 to vector<8x128xf32>
      %119 = arith.select %115, %117, %118 : vector<8x128xi1>, vector<8x128xf32>
      %c0_45 = arith.constant 0 : index
      %c0_46 = arith.constant 0 : index
      %120 = vector.load %arg5[%c0_45, %c0_46] : memref<8x128xf32, #tpu.memory_space<vmem>>, vector<8x128xf32>
      tpu.vector_store %arg5[%c0_45, %c0_46], %119 {strides = array<i32>} : memref<8x128xf32, #tpu.memory_space<vmem>>, vector<8x128xf32>,
    } else {
    }
    return
  }
  func.func @transform_0(%arg0: i32) -> (i32, i32) {
    %c0_i32 = arith.constant 0 : i32
    %c0_i32_0 = arith.constant 0 : i32
    return %arg0, %c0_i32 : i32, i32
  }
  func.func @transform_1(%arg0: i32) -> (i32, i32) {
    %c0_i32 = arith.constant 0 : i32
    %c0_i32_0 = arith.constant 0 : i32
    return %arg0, %c0_i32 : i32, i32
  }
  func.func @transform_2(%arg0: i32) -> (i32, i32) {
    %c0_i32 = arith.constant 0 : i32
    %c0_i32_0 = arith.constant 0 : i32
    %c0_i32_1 = arith.constant 0 : i32
    return %c0_i32, %c0_i32_0 : i32, i32
  }
  func.func @transform_3(%arg0: i32) -> (i32, i32) {
    %c0_i32 = arith.constant 0 : i32
    %c0_i32_0 = arith.constant 0 : i32
    %c0_i32_1 = arith.constant 0 : i32
    return %c0_i32, %c0_i32_0 : i32, i32
  }
  func.func @transform_4(%arg0: i32) -> (i32, i32) {
    %c0_i32 = arith.constant 0 : i32
    %c0_i32_0 = arith.constant 0 : i32
    %c0_i32_1 = arith.constant 0 : i32
    return %c0_i32, %c0_i32_0 : i32, i32
  }
}

</mosaic_0001>

<llo_original>
// kernel: center_loss_forward.1
$region0: #{center_loss_forward.1}
  #allocation0 [shape = 'u32[]', space=smem, size = 0x4, offset = 0x4, fixed_abs, tag = 'smem constant byte address 0x4 - core index']
  #allocation1 [shape = 'u32[144,128]{1,0:T(1,128)}', space=vmem, size = 0x12000, scoped, tag = 'internal scratch']
  %s0 = inlined_call_operand.vmem [shape: s32[16,1], index: 0, kind: input, shape index: {}]
  %s1 = inlined_call_operand.vmem [shape: f32[16,128], index: 1, kind: input, shape index: {}]
  %s2 = inlined_call_operand.vmem [shape: f32[128,128], index: 2, kind: input, shape index: {}]
  %s3 = inlined_call_operand.vmem [shape: f32[2,128], index: 3, kind: input, shape index: {}]
  %s4 = inlined_call_operand.vmem [shape: f32[8,128], index: 4, kind: output, shape index: {}]
  %s5 = sld [smem:[#allocation0]]
  $region34: #{center_loss_forward.1} parent=0
    _
  %s7 = ssub.s32 1, %s5
  %s8 = scalar_select 0, %s7, %s5
  // Predicated region
  $region2: #{center_loss_forward.1} parent=0 // pred_check
    _
  $region3: #{center_loss_forward.1} parent=0 // pred_check_branch
    %10 = sbr.rel (0) target = $region5
  $region4: #{center_loss_forward.1} parent=0 // pred_region
    _
  $region5: #{center_loss_forward.1} parent=0 // pred_fallthru
    _
  // Predicated region
  $region6: #{center_loss_forward.1} parent=0 // pred_check
    _
  $region7: #{center_loss_forward.1} parent=0 // pred_check_branch
    %12 = sbr.rel (0) target = $region9
  $region8: #{center_loss_forward.1} parent=0 // pred_region
    _
  $region9: #{center_loss_forward.1} parent=0 // pred_fallthru
    _
  // Predicated region
  $region10: #{center_loss_forward.1} parent=0 // pred_check
    _
  $region11: #{center_loss_forward.1} parent=0 // pred_check_branch
    %14 = sbr.rel (0) target = $region13
  $region12: #{center_loss_forward.1} parent=0 // pred_region
    _
  $region13: #{center_loss_forward.1} parent=0 // pred_fallthru
    _
  // Predicated region
  $region14: #{center_loss_forward.1} parent=0 // pred_check
    _
  $region15: #{center_loss_forward.1} parent=0 // pred_check_branch
    %16 = sbr.rel (0) target = $region17
  $region16: #{center_loss_forward.1} parent=0 // pred_region
    _
  $region17: #{center_loss_forward.1} parent=0 // pred_fallthru
    _
  %p17 = scmp.eq.s32.totalorder 0, 0
  // Predicated region
  $region18: #{center_loss_forward.1} parent=0 // pred_check
    %p18 = pneg %p17
  $region19: #{center_loss_forward.1} parent=0 // pred_check_branch
    %20 = sbr.rel (%p18) target = $region21
  $region20: #{center_loss_forward.1} parent=0 // pred_region
    %21 = vst [vmem:[%s4] sm:$0xff] 0.0
  $region21: #{center_loss_forward.1} parent=0 // pred_fallthru
    _
  %v22 = vld [vmem:[%s0] sm:$0xff]
  %v23 = vld [vmem:[%s0 + $0x8] sm:$0xff]
  %v24 = vld [vmem:[%s1] sm:$0xff]
  %v25 = vld [vmem:[%s1 + $0x8] sm:$0xff]
  %s26 = smul.u32 0, 16
  %v27 = vlaneseq
  %v28 = vshrl.u32 %v27, 7
  %v29 = vadd.s32 %v28, 8
  %v30 = vstv %s26
  %v31 = vadd.s32 %v30, %v28
  %v32 = vadd.s32 %v30, %v29
  %vm33 = vcmp.lt.s32.totalorder %v31, 16
  %vm34 = vcmp.lt.s32.totalorder %v32, 16
  %vm35 = vcmp.ne.s32.totalorder %v22, 0
  %vm36 = vcmp.ne.s32.totalorder %v23, 0
  %vm37 = vmand %vm33, %vm35
  %vm38 = vmand %vm34, %vm36
  %v39 = vld [vmem:[%s2] sm:$0xff]
  %v40 = vld [vmem:[%s2 + $0x8] sm:$0xff]
  %v41 = vld [vmem:[%s2 + $0x10] sm:$0xff]
  %v42 = vld [vmem:[%s2 + $0x18] sm:$0xff]
  %v43 = vld [vmem:[%s2 + $0x20] sm:$0xff]
  %v44 = vld [vmem:[%s2 + $0x28] sm:$0xff]
  %v45 = vld [vmem:[%s2 + $0x30] sm:$0xff]
  %v46 = vld [vmem:[%s2 + $0x38] sm:$0xff]
  %v47 = vld [vmem:[%s2 + $0x40] sm:$0xff]
  %v48 = vld [vmem:[%s2 + $0x48] sm:$0xff]
  %v49 = vld [vmem:[%s2 + $0x50] sm:$0xff]
  %v50 = vld [vmem:[%s2 + $0x58] sm:$0xff]
  %v51 = vld [vmem:[%s2 + $0x60] sm:$0xff]
  %v52 = vld [vmem:[%s2 + $0x68] sm:$0xff]
  %v53 = vld [vmem:[%s2 + $0x70] sm:$0xff]
  %v54 = vld [vmem:[%s2 + $0x78] sm:$0xff]
  %55 = vmatprep.subr.mxu0 0.0
  %v56 = vand.u32 %v54, 4294901760
  %57 = vmatpush1.msra.mxu0 %v56
  %58 = vmatprep.subr.mxu0 0.0
  %v59 = vand.u32 %v53, 4294901760
  %60 = vmatpush1.msra.mxu0 %v59
  %61 = vmatprep.subr.mxu0 0.0
  %v62 = vand.u32 %v52, 4294901760
  %63 = vmatpush1.msra.mxu0 %v62
  %64 = vmatprep.subr.mxu0 0.0
  %v65 = vand.u32 %v51, 4294901760
  %66 = vmatpush1.msra.mxu0 %v65
  %67 = vmatprep.subr.mxu0 0.0
  %v68 = vand.u32 %v50, 4294901760
  %69 = vmatpush1.msra.mxu0 %v68
  %70 = vmatprep.subr.mxu0 0.0
  %v71 = vand.u32 %v49, 4294901760
  %72 = vmatpush1.msra.mxu0 %v71
  %73 = vmatprep.subr.mxu0 0.0
  %v74 = vand.u32 %v48, 4294901760
  %75 = vmatpush1.msra.mxu0 %v74
  %76 = vmatprep.subr.mxu0 0.0
  %v77 = vand.u32 %v47, 4294901760
  %78 = vmatpush1.msra.mxu0 %v77
  %79 = vmatprep.subr.mxu0 0.0
  %v80 = vand.u32 %v46, 4294901760
  %81 = vmatpush1.msra.mxu0 %v80
  %82 = vmatprep.subr.mxu0 0.0
  %v83 = vand.u32 %v45, 4294901760
  %84 = vmatpush1.msra.mxu0 %v83
  %85 = vmatprep.subr.mxu0 0.0
  %v86 = vand.u32 %v44, 4294901760
  %87 = vmatpush1.msra.mxu0 %v86
  %88 = vmatprep.subr.mxu0 0.0
  %v89 = vand.u32 %v43, 4294901760
  %90 = vmatpush1.msra.mxu0 %v89
  %91 = vmatprep.subr.mxu0 0.0
  %v92 = vand.u32 %v42, 4294901760
  %93 = vmatpush1.msra.mxu0 %v92
  %94 = vmatprep.subr.mxu0 0.0
  %v95 = vand.u32 %v41, 4294901760
  %96 = vmatpush1.msra.mxu0 %v95
  %97 = vmatprep.subr.mxu0 0.0
  %v98 = vand.u32 %v40, 4294901760
  %99 = vmatpush1.msra.mxu0 %v98
  %100 = vmatprep.subr.mxu0 0.0
  %v101 = vand.u32 %v39, 4294901760
  %102 = vmatpush1.msra.mxu0 %v101
  %103 = vmatprep.subr.mxu0 0.0
  %104 = vmatpush2.msra.mxu0 0.0
  %105 = vmatprep.subr.mxu0 0.0
  %106 = vmatpush2.msra.mxu0 0.0
  %107 = vmatprep.subr.mxu0 0.0
  %108 = vmatpush2.msra.mxu0 0.0
  %109 = vmatprep.subr.mxu0 0.0
  %110 = vmatpush2.msra.mxu0 0.0
  %111 = vmatprep.subr.mxu0 0.0
  %112 = vmatpush2.msra.mxu0 0.0
  %113 = vmatprep.subr.mxu0 0.0
  %114 = vmatpush2.msra.mxu0 0.0
  %115 = vmatprep.subr.mxu0 0.0
  %116 = vmatpush2.msra.mxu0 0.0
  %117 = vmatprep.subr.mxu0 0.0
  %118 = vmatpush2.msra.mxu0 0.0
  %119 = vmatprep.subr.mxu0 0.0
  %120 = vmatpush2.msra.mxu0 0.0
  %121 = vmatprep.subr.mxu0 0.0
  %122 = vmatpush2.msra.mxu0 0.0
  %123 = vmatprep.subr.mxu0 0.0
  %124 = vmatpush2.msra.mxu0 0.0
  %125 = vmatprep.subr.mxu0 0.0
  %126 = vmatpush2.msra.mxu0 0.0
  %127 = vmatprep.subr.mxu0 0.0
  %128 = vmatpush2.msra.mxu0 0.0
  %129 = vmatprep.subr.mxu0 0.0
  %130 = vmatpush2.msra.mxu0 0.0
  %131 = vmatprep.subr.mxu0 0.0
  %132 = vmatpush2.msra.mxu0 0.0
  %133 = vmatprep.subr.mxu0 0.0
  %134 = vmatpush2.msra.mxu0 0.0
  %135 = vmatprep.mubr.f32.mxu0 0.0
  %v136 = vand.u32 %v24, 4294901760
  %v137 = vsub.f32 %v24, %v136
  %v138 = vand.u32 %v137, 4294901760
  %v139 = vsub.f32 %v137, %v138
  %v140 = vand.u32 %v139, 4294901760
  %141 = vmatmul.mubr.f32.gmra.mxu0 %v140
  %v142 = vpop.f32.mrf.mxu0
  %v143 = vadd.f32 0.0, %v142
  %v144 = vpop.f32.mrf.mxu0
  %145 = vmatprep.mubr.f32.mxu0 0.0
  %v146 = vand.u32 %v25, 4294901760
  %v147 = vsub.f32 %v25, %v146
  %v148 = vand.u32 %v147, 4294901760
  %v149 = vsub.f32 %v147, %v148
  %v150 = vand.u32 %v149, 4294901760
  %151 = vmatmul.mubr.f32.gmra.mxu0 %v150
  %v152 = vpop.f32.mrf.mxu0
  %v153 = vadd.f32 0.0, %v152
  %v154 = vpop.f32.mrf.mxu0
  %155 = vdwg.mxu0
  %156 = vmatprep.subr.mxu0 0.0
  %v157 = vand.u32 %v54, 4294901760
  %v158 = vsub.f32 %v54, %v157
  %v159 = vand.u32 %v158, 4294901760
  %v160 = vsub.f32 %v158, %v159
  %v161 = vand.u32 %v160, 4294901760
  %162 = vmatpush1.msra.mxu0 %v161
  %163 = vmatprep.subr.mxu0 0.0
  %v164 = vand.u32 %v53, 4294901760
  %v165 = vsub.f32 %v53, %v164
  %v166 = vand.u32 %v165, 4294901760
  %v167 = vsub.f32 %v165, %v166
  %v168 = vand.u32 %v167, 4294901760
  %169 = vmatpush1.msra.mxu0 %v168
  %170 = vmatprep.subr.mxu0 0.0
  %v171 = vand.u32 %v52, 4294901760
  %v172 = vsub.f32 %v52, %v171
  %v173 = vand.u32 %v172, 4294901760
  %v174 = vsub.f32 %v172, %v173
  %v175 = vand.u32 %v174, 4294901760
  %176 = vmatpush1.msra.mxu0 %v175
  %177 = vmatprep.subr.mxu0 0.0
  %v178 = vand.u32 %v51, 4294901760
  %v179 = vsub.f32 %v51, %v178
  %v180 = vand.u32 %v179, 4294901760
  %v181 = vsub.f32 %v179, %v180
  %v182 = vand.u32 %v181, 4294901760
  %183 = vmatpush1.msra.mxu0 %v182
  %184 = vmatprep.subr.mxu0 0.0
  %v185 = vand.u32 %v50, 4294901760
  %v186 = vsub.f32 %v50, %v185
  %v187 = vand.u32 %v186, 4294901760
  %v188 = vsub.f32 %v186, %v187
  %v189 = vand.u32 %v188, 4294901760
  %190 = vmatpush1.msra.mxu0 %v189
  %191 = vmatprep.subr.mxu0 0.0
  %v192 = vand.u32 %v49, 4294901760
  %v193 = vsub.f32 %v49, %v192
  %v194 = vand.u32 %v193, 4294901760
  %v195 = vsub.f32 %v193, %v194
  %v196 = vand.u32 %v195, 4294901760
  %197 = vmatpush1.msra.mxu0 %v196
  %198 = vmatprep.subr.mxu0 0.0
  %v199 = vand.u32 %v48, 4294901760
  %v200 = vsub.f32 %v48, %v199
  %v201 = vand.u32 %v200, 4294901760
  %v202 = vsub.f32 %v200, %v201
  %v203 = vand.u32 %v202, 4294901760
  %204 = vmatpush1.msra.mxu0 %v203
  %205 = vmatprep.subr.mxu0 0.0
  %v206 = vand.u32 %v47, 4294901760
  %v207 = vsub.f32 %v47, %v206
  %v208 = vand.u32 %v207, 4294901760
  %v209 = vsub.f32 %v207, %v208
  %v210 = vand.u32 %v209, 4294901760
  %211 = vmatpush1.msra.mxu0 %v210
  %212 = vmatprep.subr.mxu0 0.0
  %v213 = vand.u32 %v46, 4294901760
  %v214 = vsub.f32 %v46, %v213
  %v215 = vand.u32 %v214, 4294901760
  %v216 = vsub.f32 %v214, %v215
  %v217 = vand.u32 %v216, 4294901760
  %218 = vmatpush1.msra.mxu0 %v217
  %219 = vmatprep.subr.mxu0 0.0
  %v220 = vand.u32 %v45, 4294901760
  %v221 = vsub.f32 %v45, %v220
  %v222 = vand.u32 %v221, 4294901760
  %v223 = vsub.f32 %v221, %v222
  %v224 = vand.u32 %v223, 4294901760
  %225 = vmatpush1.msra.mxu0 %v224
  %226 = vmatprep.subr.mxu0 0.0
  %v227 = vand.u32 %v44, 4294901760
  %v228 = vsub.f32 %v44, %v227
  %v229 = vand.u32 %v228, 4294901760
  %v230 = vsub.f32 %v228, %v229
  %v231 = vand.u32 %v230, 4294901760
  %232 = vmatpush1.msra.mxu0 %v231
  %233 = vmatprep.subr.mxu0 0.0
  %v234 = vand.u32 %v43, 4294901760
  %v235 = vsub.f32 %v43, %v234
  %v236 = vand.u32 %v235, 4294901760
  %v237 = vsub.f32 %v235, %v236
  %v238 = vand.u32 %v237, 4294901760
  %239 = vmatpush1.msra.mxu0 %v238
  %240 = vmatprep.subr.mxu0 0.0
  %v241 = vand.u32 %v42, 4294901760
  %v242 = vsub.f32 %v42, %v241
  %v243 = vand.u32 %v242, 4294901760
  %v244 = vsub.f32 %v242, %v243
  %v245 = vand.u32 %v244, 4294901760
  %246 = vmatpush1.msra.mxu0 %v245
  %247 = vmatprep.subr.mxu0 0.0
  %v248 = vand.u32 %v41, 4294901760
  %v249 = vsub.f32 %v41, %v248
  %v250 = vand.u32 %v249, 4294901760
  %v251 = vsub.f32 %v249, %v250
  %v252 = vand.u32 %v251, 4294901760
  %253 = vmatpush1.msra.mxu0 %v252
  %254 = vmatprep.subr.mxu0 0.0
  %v255 = vand.u32 %v40, 4294901760
  %v256 = vsub.f32 %v40, %v255
  %v257 = vand.u32 %v256, 4294901760
  %v258 = vsub.f32 %v256, %v257
  %v259 = vand.u32 %v258, 4294901760
  %260 = vmatpush1.msra.mxu0 %v259
  %261 = vmatprep.subr.mxu0 0.0
  %v262 = vand.u32 %v39, 4294901760
  %v263 = vsub.f32 %v39, %v262
  %v264 = vand.u32 %v263, 4294901760
  %v265 = vsub.f32 %v263, %v264
  %v266 = vand.u32 %v265, 4294901760
  %267 = vmatpush1.msra.mxu0 %v266
  %268 = vmatprep.subr.mxu0 0.0
  %269 = vmatpush2.msra.mxu0 0.0
  %270 = vmatprep.subr.mxu0 0.0
  %271 = vmatpush2.msra.mxu0 0.0
  %272 = vmatprep.subr.mxu0 0.0
  %273 = vmatpush2.msra.mxu0 0.0
  %274 = vmatprep.subr.mxu0 0.0
  %275 = vmatpush2.msra.mxu0 0.0
  %276 = vmatprep.subr.mxu0 0.0
  %277 = vmatpush2.msra.mxu0 0.0
  %278 = vmatprep.subr.mxu0 0.0
  %279 = vmatpush2.msra.mxu0 0.0
  %280 = vmatprep.subr.mxu0 0.0
  %281 = vmatpush2.msra.mxu0 0.0
  %282 = vmatprep.subr.mxu0 0.0
  %283 = vmatpush2.msra.mxu0 0.0
  %284 = vmatprep.subr.mxu0 0.0
  %285 = vmatpush2.msra.mxu0 0.0
  %286 = vmatprep.subr.mxu0 0.0
  %287 = vmatpush2.msra.mxu0 0.0
  %288 = vmatprep.subr.mxu0 0.0
  %289 = vmatpush2.msra.mxu0 0.0
  %290 = vmatprep.subr.mxu0 0.0
  %291 = vmatpush2.msra.mxu0 0.0
  %292 = vmatprep.subr.mxu0 0.0
  %293 = vmatpush2.msra.mxu0 0.0
  %294 = vmatprep.subr.mxu0 0.0
  %295 = vmatpush2.msra.mxu0 0.0
  %296 = vmatprep.subr.mxu0 0.0
  %297 = vmatpush2.msra.mxu0 0.0
  %298 = vmatprep.subr.mxu0 0.0
  %299 = vmatpush2.msra.mxu0 0.0
  %300 = vmatprep.mubr.f32.mxu0 0.0
  %v301 = vand.u32 %v24, 4294901760
  %302 = vmatmul.mubr.f32.gmra.mxu0 %v301
  %v303 = vpop.f32.mrf.mxu0
  %v304 = vadd.f32 %v143, %v303
  %v305 = vpop.f32.mrf.mxu0
  %306 = vmatprep.mubr.f32.mxu0 0.0
  %v307 = vand.u32 %v25, 4294901760
  %308 = vmatmul.mubr.f32.gmra.mxu0 %v307
  %v309 = vpop.f32.mrf.mxu0
  %v310 = vadd.f32 %v153, %v309
  %v311 = vpop.f32.mrf.mxu0
  %312 = vdwg.mxu0
  %313 = vmatprep.subr.mxu0 0.0
  %v314 = vand.u32 %v54, 4294901760
  %v315 = vsub.f32 %v54, %v314
  %316 = vmatpush1.msra.mxu0 %v315
  %317 = vmatprep.subr.mxu0 0.0
  %v318 = vand.u32 %v53, 4294901760
  %v319 = vsub.f32 %v53, %v318
  %320 = vmatpush1.msra.mxu0 %v319
  %321 = vmatprep.subr.mxu0 0.0
  %v322 = vand.u32 %v52, 4294901760
  %v323 = vsub.f32 %v52, %v322
  %324 = vmatpush1.msra.mxu0 %v323
  %325 = vmatprep.subr.mxu0 0.0
  %v326 = vand.u32 %v51, 4294901760
  %v327 = vsub.f32 %v51, %v326
  %328 = vmatpush1.msra.mxu0 %v327
  %329 = vmatprep.subr.mxu0 0.0
  %v330 = vand.u32 %v50, 4294901760
  %v331 = vsub.f32 %v50, %v330
  %332 = vmatpush1.msra.mxu0 %v331
  %333 = vmatprep.subr.mxu0 0.0
  %v334 = vand.u32 %v49, 4294901760
  %v335 = vsub.f32 %v49, %v334
  %336 = vmatpush1.msra.mxu0 %v335
  %337 = vmatprep.subr.mxu0 0.0
  %v338 = vand.u32 %v48, 4294901760
  %v339 = vsub.f32 %v48, %v338
  %340 = vmatpush1.msra.mxu0 %v339
  %341 = vmatprep.subr.mxu0 0.0
  %v342 = vand.u32 %v47, 4294901760
  %v343 = vsub.f32 %v47, %v342
  %344 = vmatpush1.msra.mxu0 %v343
  %345 = vmatprep.subr.mxu0 0.0
  %v346 = vand.u32 %v46, 4294901760
  %v347 = vsub.f32 %v46, %v346
  %348 = vmatpush1.msra.mxu0 %v347
  %349 = vmatprep.subr.mxu0 0.0
  %v350 = vand.u32 %v45, 4294901760
  %v351 = vsub.f32 %v45, %v350
  %352 = vmatpush1.msra.mxu0 %v351
  %353 = vmatprep.subr.mxu0 0.0
  %v354 = vand.u32 %v44, 4294901760
  %v355 = vsub.f32 %v44, %v354
  %356 = vmatpush1.msra.mxu0 %v355
  %357 = vmatprep.subr.mxu0 0.0
  %v358 = vand.u32 %v43, 4294901760
  %v359 = vsub.f32 %v43, %v358
  %360 = vmatpush1.msra.mxu0 %v359
  %361 = vmatprep.subr.mxu0 0.0
  %v362 = vand.u32 %v42, 4294901760
  %v363 = vsub.f32 %v42, %v362
  %364 = vmatpush1.msra.mxu0 %v363
  %365 = vmatprep.subr.mxu0 0.0
  %v366 = vand.u32 %v41, 4294901760
  %v367 = vsub.f32 %v41, %v366
  %368 = vmatpush1.msra.mxu0 %v367
  %369 = vmatprep.subr.mxu0 0.0
  %v370 = vand.u32 %v40, 4294901760
  %v371 = vsub.f32 %v40, %v370
  %372 = vmatpush1.msra.mxu0 %v371
  %373 = vmatprep.subr.mxu0 0.0
  %v374 = vand.u32 %v39, 4294901760
  %v375 = vsub.f32 %v39, %v374
  %376 = vmatpush1.msra.mxu0 %v375
  %377 = vmatprep.subr.mxu0 0.0
  %378 = vmatpush2.msra.mxu0 0.0
  %379 = vmatprep.subr.mxu0 0.0
  %380 = vmatpush2.msra.mxu0 0.0
  %381 = vmatprep.subr.mxu0 0.0
  %382 = vmatpush2.msra.mxu0 0.0
  %383 = vmatprep.subr.mxu0 0.0
  %384 = vmatpush2.msra.mxu0 0.0
  %385 = vmatprep.subr.mxu0 0.0
  %386 = vmatpush2.msra.mxu0 0.0
  %387 = vmatprep.subr.mxu0 0.0
  %388 = vmatpush2.msra.mxu0 0.0
  %389 = vmatprep.subr.mxu0 0.0
  %390 = vmatpush2.msra.mxu0 0.0
  %391 = vmatprep.subr.mxu0 0.0
  %392 = vmatpush2.msra.mxu0 0.0
  %393 = vmatprep.subr.mxu0 0.0
  %394 = vmatpush2.msra.mxu0 0.0
  %395 = vmatprep.subr.mxu0 0.0
  %396 = vmatpush2.msra.mxu0 0.0
  %397 = vmatprep.subr.mxu0 0.0
  %398 = vmatpush2.msra.mxu0 0.0
  %399 = vmatprep.subr.mxu0 0.0
  %400 = vmatpush2.msra.mxu0 0.0
  %401 = vmatprep.subr.mxu0 0.0
  %402 = vmatpush2.msra.mxu0 0.0
  %403 = vmatprep.subr.mxu0 0.0
  %404 = vmatpush2.msra.mxu0 0.0
  %405 = vmatprep.subr.mxu0 0.0
  %406 = vmatpush2.msra.mxu0 0.0
  %407 = vmatprep.subr.mxu0 0.0
  %408 = vmatpush2.msra.mxu0 0.0
  %409 = vmatprep.mubr.f32.mxu0 0.0
  %v410 = vand.u32 %v24, 4294901760
  %v411 = vsub.f32 %v24, %v410
  %412 = vmatmul.mubr.f32.gmra.mxu0 %v411
  %v413 = vpop.f32.mrf.mxu0
  %v414 = vadd.f32 %v304, %v413
  %v415 = vpop.f32.mrf.mxu0
  %416 = vmatprep.mubr.f32.mxu0 0.0
  %v417 = vand.u32 %v25, 4294901760
  %v418 = vsub.f32 %v25, %v417
  %419 = vmatmul.mubr.f32.gmra.mxu0 %v418
  %v420 = vpop.f32.mrf.mxu0
  %v421 = vadd.f32 %v310, %v420
  %v422 = vpop.f32.mrf.mxu0
  %423 = vdwg.mxu0
  %424 = vmatprep.subr.mxu0 0.0
  %v425 = vand.u32 %v54, 4294901760
  %426 = vmatpush1.msra.mxu0 %v425
  %427 = vmatprep.subr.mxu0 0.0
  %v428 = vand.u32 %v53, 4294901760
  %429 = vmatpush1.msra.mxu0 %v428
  %430 = vmatprep.subr.mxu0 0.0
  %v431 = vand.u32 %v52, 4294901760
  %432 = vmatpush1.msra.mxu0 %v431
  %433 = vmatprep.subr.mxu0 0.0
  %v434 = vand.u32 %v51, 4294901760
  %435 = vmatpush1.msra.mxu0 %v434
  %436 = vmatprep.subr.mxu0 0.0
  %v437 = vand.u32 %v50, 4294901760
  %438 = vmatpush1.msra.mxu0 %v437
  %439 = vmatprep.subr.mxu0 0.0
  %v440 = vand.u32 %v49, 4294901760
  %441 = vmatpush1.msra.mxu0 %v440
  %442 = vmatprep.subr.mxu0 0.0
  %v443 = vand.u32 %v48, 4294901760
  %444 = vmatpush1.msra.mxu0 %v443
  %445 = vmatprep.subr.mxu0 0.0
  %v446 = vand.u32 %v47, 4294901760
  %447 = vmatpush1.msra.mxu0 %v446
  %448 = vmatprep.subr.mxu0 0.0
  %v449 = vand.u32 %v46, 4294901760
  %450 = vmatpush1.msra.mxu0 %v449
  %451 = vmatprep.subr.mxu0 0.0
  %v452 = vand.u32 %v45, 4294901760
  %453 = vmatpush1.msra.mxu0 %v452
  %454 = vmatprep.subr.mxu0 0.0
  %v455 = vand.u32 %v44, 4294901760
  %456 = vmatpush1.msra.mxu0 %v455
  %457 = vmatprep.subr.mxu0 0.0
  %v458 = vand.u32 %v43, 4294901760
  %459 = vmatpush1.msra.mxu0 %v458
  %460 = vmatprep.subr.mxu0 0.0
  %v461 = vand.u32 %v42, 4294901760
  %462 = vmatpush1.msra.mxu0 %v461
  %463 = vmatprep.subr.mxu0 0.0
  %v464 = vand.u32 %v41, 4294901760
  %465 = vmatpush1.msra.mxu0 %v464
  %466 = vmatprep.subr.mxu0 0.0
  %v467 = vand.u32 %v40, 4294901760
  %468 = vmatpush1.msra.mxu0 %v467
  %469 = vmatprep.subr.mxu0 0.0
  %v470 = vand.u32 %v39, 4294901760
  %471 = vmatpush1.msra.mxu0 %v470
  %472 = vmatprep.subr.mxu0 0.0
  %473 = vmatpush2.msra.mxu0 0.0
  %474 = vmatprep.subr.mxu0 0.0
  %475 = vmatpush2.msra.mxu0 0.0
  %476 = vmatprep.subr.mxu0 0.0
  %477 = vmatpush2.msra.mxu0 0.0
  %478 = vmatprep.subr.mxu0 0.0
  %479 = vmatpush2.msra.mxu0 0.0
  %480 = vmatprep.subr.mxu0 0.0
  %481 = vmatpush2.msra.mxu0 0.0
  %482 = vmatprep.subr.mxu0 0.0
  %483 = vmatpush2.msra.mxu0 0.0
  %484 = vmatprep.subr.mxu0 0.0
  %485 = vmatpush2.msra.mxu0 0.0
  %486 = vmatprep.subr.mxu0 0.0
  %487 = vmatpush2.msra.mxu0 0.0
  %488 = vmatprep.subr.mxu0 0.0
  %489 = vmatpush2.msra.mxu0 0.0
  %490 = vmatprep.subr.mxu0 0.0
  %491 = vmatpush2.msra.mxu0 0.0
  %492 = vmatprep.subr.mxu0 0.0
  %493 = vmatpush2.msra.mxu0 0.0
  %494 = vmatprep.subr.mxu0 0.0
  %495 = vmatpush2.msra.mxu0 0.0
  %496 = vmatprep.subr.mxu0 0.0
  %497 = vmatpush2.msra.mxu0 0.0
  %498 = vmatprep.subr.mxu0 0.0
  %499 = vmatpush2.msra.mxu0 0.0
  %500 = vmatprep.subr.mxu0 0.0
  %501 = vmatpush2.msra.mxu0 0.0
  %502 = vmatprep.subr.mxu0 0.0
  %503 = vmatpush2.msra.mxu0 0.0
  %504 = vmatprep.mubr.f32.mxu0 0.0
  %v505 = vand.u32 %v24, 4294901760
  %v506 = vsub.f32 %v24, %v505
  %v507 = vand.u32 %v506, 4294901760
  %508 = vmatmul.mubr.f32.gmra.mxu0 %v507
  %v509 = vpop.f32.mrf.mxu0
  %v510 = vadd.f32 %v414, %v509
  %v511 = vpop.f32.mrf.mxu0
  %512 = vmatprep.mubr.f32.mxu0 0.0
  %v513 = vand.u32 %v25, 4294901760
  %v514 = vsub.f32 %v25, %v513
  %v515 = vand.u32 %v514, 4294901760
  %516 = vmatmul.mubr.f32.gmra.mxu0 %v515
  %v517 = vpop.f32.mrf.mxu0
  %v518 = vadd.f32 %v421, %v517
  %v519 = vpop.f32.mrf.mxu0
  %520 = vdwg.mxu0
  %521 = vmatprep.subr.mxu0 0.0
  %v522 = vand.u32 %v54, 4294901760
  %v523 = vsub.f32 %v54, %v522
  %v524 = vand.u32 %v523, 4294901760
  %525 = vmatpush1.msra.mxu0 %v524
  %526 = vmatprep.subr.mxu0 0.0
  %v527 = vand.u32 %v53, 4294901760
  %v528 = vsub.f32 %v53, %v527
  %v529 = vand.u32 %v528, 4294901760
  %530 = vmatpush1.msra.mxu0 %v529
  %531 = vmatprep.subr.mxu0 0.0
  %v532 = vand.u32 %v52, 4294901760
  %v533 = vsub.f32 %v52, %v532
  %v534 = vand.u32 %v533, 4294901760
  %535 = vmatpush1.msra.mxu0 %v534
  %536 = vmatprep.subr.mxu0 0.0
  %v537 = vand.u32 %v51, 4294901760
  %v538 = vsub.f32 %v51, %v537
  %v539 = vand.u32 %v538, 4294901760
  %540 = vmatpush1.msra.mxu0 %v539
  %541 = vmatprep.subr.mxu0 0.0
  %v542 = vand.u32 %v50, 4294901760
  %v543 = vsub.f32 %v50, %v542
  %v544 = vand.u32 %v543, 4294901760
  %545 = vmatpush1.msra.mxu0 %v544
  %546 = vmatprep.subr.mxu0 0.0
  %v547 = vand.u32 %v49, 4294901760
  %v548 = vsub.f32 %v49, %v547
  %v549 = vand.u32 %v548, 4294901760
  %550 = vmatpush1.msra.mxu0 %v549
  %551 = vmatprep.subr.mxu0 0.0
  %v552 = vand.u32 %v48, 4294901760
  %v553 = vsub.f32 %v48, %v552
  %v554 = vand.u32 %v553, 4294901760
  %555 = vmatpush1.msra.mxu0 %v554
  %556 = vmatprep.subr.mxu0 0.0
  %v557 = vand.u32 %v47, 4294901760
  %v558 = vsub.f32 %v47, %v557
  %v559 = vand.u32 %v558, 4294901760
  %560 = vmatpush1.msra.mxu0 %v559
  %561 = vmatprep.subr.mxu0 0.0
  %v562 = vand.u32 %v46, 4294901760
  %v563 = vsub.f32 %v46, %v562
  %v564 = vand.u32 %v563, 4294901760
  %565 = vmatpush1.msra.mxu0 %v564
  %566 = vmatprep.subr.mxu0 0.0
  %v567 = vand.u32 %v45, 4294901760
  %v568 = vsub.f32 %v45, %v567
  %v569 = vand.u32 %v568, 4294901760
  %570 = vmatpush1.msra.mxu0 %v569
  %571 = vmatprep.subr.mxu0 0.0
  %v572 = vand.u32 %v44, 4294901760
  %v573 = vsub.f32 %v44, %v572
  %v574 = vand.u32 %v573, 4294901760
  %575 = vmatpush1.msra.mxu0 %v574
  %576 = vmatprep.subr.mxu0 0.0
  %v577 = vand.u32 %v43, 4294901760
  %v578 = vsub.f32 %v43, %v577
  %v579 = vand.u32 %v578, 4294901760
  %580 = vmatpush1.msra.mxu0 %v579
  %581 = vmatprep.subr.mxu0 0.0
  %v582 = vand.u32 %v42, 4294901760
  %v583 = vsub.f32 %v42, %v582
  %v584 = vand.u32 %v583, 4294901760
  %585 = vmatpush1.msra.mxu0 %v584
  %586 = vmatprep.subr.mxu0 0.0
  %v587 = vand.u32 %v41, 4294901760
  %v588 = vsub.f32 %v41, %v587
  %v589 = vand.u32 %v588, 4294901760
  %590 = vmatpush1.msra.mxu0 %v589
  %591 = vmatprep.subr.mxu0 0.0
  %v592 = vand.u32 %v40, 4294901760
  %v593 = vsub.f32 %v40, %v592
  %v594 = vand.u32 %v593, 4294901760
  %595 = vmatpush1.msra.mxu0 %v594
  %596 = vmatprep.subr.mxu0 0.0
  %v597 = vand.u32 %v39, 4294901760
  %v598 = vsub.f32 %v39, %v597
  %v599 = vand.u32 %v598, 4294901760
  %600 = vmatpush1.msra.mxu0 %v599
  %601 = vmatprep.subr.mxu0 0.0
  %602 = vmatpush2.msra.mxu0 0.0
  %603 = vmatprep.subr.mxu0 0.0
  %604 = vmatpush2.msra.mxu0 0.0
  %605 = vmatprep.subr.mxu0 0.0
  %606 = vmatpush2.msra.mxu0 0.0
  %607 = vmatprep.subr.mxu0 0.0
  %608 = vmatpush2.msra.mxu0 0.0
  %609 = vmatprep.subr.mxu0 0.0
  %610 = vmatpush2.msra.mxu0 0.0
  %611 = vmatprep.subr.mxu0 0.0
  %612 = vmatpush2.msra.mxu0 0.0
  %613 = vmatprep.subr.mxu0 0.0
  %614 = vmatpush2.msra.mxu0 0.0
  %615 = vmatprep.subr.mxu0 0.0
  %616 = vmatpush2.msra.mxu0 0.0
  %617 = vmatprep.subr.mxu0 0.0
  %618 = vmatpush2.msra.mxu0 0.0
  %619 = vmatprep.subr.mxu0 0.0
  %620 = vmatpush2.msra.mxu0 0.0
  %621 = vmatprep.subr.mxu0 0.0
  %622 = vmatpush2.msra.mxu0 0.0
  %623 = vmatprep.subr.mxu0 0.0
  %624 = vmatpush2.msra.mxu0 0.0
  %625 = vmatprep.subr.mxu0 0.0
  %626 = vmatpush2.msra.mxu0 0.0
  %627 = vmatprep.subr.mxu0 0.0
  %628 = vmatpush2.msra.mxu0 0.0
  %629 = vmatprep.subr.mxu0 0.0
  %630 = vmatpush2.msra.mxu0 0.0
  %631 = vmatprep.subr.mxu0 0.0
  %632 = vmatpush2.msra.mxu0 0.0
  %633 = vmatprep.mubr.f32.mxu0 0.0
  %v634 = vand.u32 %v24, 4294901760
  %635 = vmatmul.mubr.f32.gmra.mxu0 %v634
  %v636 = vpop.f32.mrf.mxu0
  %v637 = vadd.f32 %v510, %v636
  %v638 = vpop.f32.mrf.mxu0
  %639 = vmatprep.mubr.f32.mxu0 0.0
  %v640 = vand.u32 %v25, 4294901760
  %641 = vmatmul.mubr.f32.gmra.mxu0 %v640
  %v642 = vpop.f32.mrf.mxu0
  %v643 = vadd.f32 %v518, %v642
  %v644 = vpop.f32.mrf.mxu0
  %645 = vdwg.mxu0
  %646 = vmatprep.subr.mxu0 0.0
  %v647 = vand.u32 %v54, 4294901760
  %648 = vmatpush1.msra.mxu0 %v647
  %649 = vmatprep.subr.mxu0 0.0
  %v650 = vand.u32 %v53, 4294901760
  %651 = vmatpush1.msra.mxu0 %v650
  %652 = vmatprep.subr.mxu0 0.0
  %v653 = vand.u32 %v52, 4294901760
  %654 = vmatpush1.msra.mxu0 %v653
  %655 = vmatprep.subr.mxu0 0.0
  %v656 = vand.u32 %v51, 4294901760
  %657 = vmatpush1.msra.mxu0 %v656
  %658 = vmatprep.subr.mxu0 0.0
  %v659 = vand.u32 %v50, 4294901760
  %660 = vmatpush1.msra.mxu0 %v659
  %661 = vmatprep.subr.mxu0 0.0
  %v662 = vand.u32 %v49, 4294901760
  %663 = vmatpush1.msra.mxu0 %v662
  %664 = vmatprep.subr.mxu0 0.0
  %v665 = vand.u32 %v48, 4294901760
  %666 = vmatpush1.msra.mxu0 %v665
  %667 = vmatprep.subr.mxu0 0.0
  %v668 = vand.u32 %v47, 4294901760
  %669 = vmatpush1.msra.mxu0 %v668
  %670 = vmatprep.subr.mxu0 0.0
  %v671 = vand.u32 %v46, 4294901760
  %672 = vmatpush1.msra.mxu0 %v671
  %673 = vmatprep.subr.mxu0 0.0
  %v674 = vand.u32 %v45, 4294901760
  %675 = vmatpush1.msra.mxu0 %v674
  %676 = vmatprep.subr.mxu0 0.0
  %v677 = vand.u32 %v44, 4294901760
  %678 = vmatpush1.msra.mxu0 %v677
  %679 = vmatprep.subr.mxu0 0.0
  %v680 = vand.u32 %v43, 4294901760
  %681 = vmatpush1.msra.mxu0 %v680
  %682 = vmatprep.subr.mxu0 0.0
  %v683 = vand.u32 %v42, 4294901760
  %684 = vmatpush1.msra.mxu0 %v683
  %685 = vmatprep.subr.mxu0 0.0
  %v686 = vand.u32 %v41, 4294901760
  %687 = vmatpush1.msra.mxu0 %v686
  %688 = vmatprep.subr.mxu0 0.0
  %v689 = vand.u32 %v40, 4294901760
  %690 = vmatpush1.msra.mxu0 %v689
  %691 = vmatprep.subr.mxu0 0.0
  %v692 = vand.u32 %v39, 4294901760
  %693 = vmatpush1.msra.mxu0 %v692
  %694 = vmatprep.subr.mxu0 0.0
  %695 = vmatpush2.msra.mxu0 0.0
  %696 = vmatprep.subr.mxu0 0.0
  %697 = vmatpush2.msra.mxu0 0.0
  %698 = vmatprep.subr.mxu0 0.0
  %699 = vmatpush2.msra.mxu0 0.0
  %700 = vmatprep.subr.mxu0 0.0
  %701 = vmatpush2.msra.mxu0 0.0
  %702 = vmatprep.subr.mxu0 0.0
  %703 = vmatpush2.msra.mxu0 0.0
  %704 = vmatprep.subr.mxu0 0.0
  %705 = vmatpush2.msra.mxu0 0.0
  %706 = vmatprep.subr.mxu0 0.0
  %707 = vmatpush2.msra.mxu0 0.0
  %708 = vmatprep.subr.mxu0 0.0
  %709 = vmatpush2.msra.mxu0 0.0
  %710 = vmatprep.subr.mxu0 0.0
  %711 = vmatpush2.msra.mxu0 0.0
  %712 = vmatprep.subr.mxu0 0.0
  %713 = vmatpush2.msra.mxu0 0.0
  %714 = vmatprep.subr.mxu0 0.0
  %715 = vmatpush2.msra.mxu0 0.0
  %716 = vmatprep.subr.mxu0 0.0
  %717 = vmatpush2.msra.mxu0 0.0
  %718 = vmatprep.subr.mxu0 0.0
  %719 = vmatpush2.msra.mxu0 0.0
  %720 = vmatprep.subr.mxu0 0.0
  %721 = vmatpush2.msra.mxu0 0.0
  %722 = vmatprep.subr.mxu0 0.0
  %723 = vmatpush2.msra.mxu0 0.0
  %724 = vmatprep.subr.mxu0 0.0
  %725 = vmatpush2.msra.mxu0 0.0
  %726 = vmatprep.mubr.f32.mxu0 0.0
  %v727 = vand.u32 %v24, 4294901760
  %728 = vmatmul.mubr.f32.gmra.mxu0 %v727
  %v729 = vpop.f32.mrf.mxu0
  %v730 = vadd.f32 %v637, %v729
  %v731 = vpop.f32.mrf.mxu0
  %732 = vmatprep.mubr.f32.mxu0 0.0
  %v733 = vand.u32 %v25, 4294901760
  %734 = vmatmul.mubr.f32.gmra.mxu0 %v733
  %v735 = vpop.f32.mrf.mxu0
  %v736 = vadd.f32 %v643, %v735
  %v737 = vpop.f32.mrf.mxu0
  %738 = vdwg.mxu0
  %v739 = vlaneseq
  %v740 = vand.u32 %v739, 127
  %741 = vset.pattern.permute.xlu0 0
  %742 = vperm.xlu0 %741, %v22
  %v743 = vpop.permute.xlu0 %742
  %744 = vset.pattern.permute.xlu0 0
  %745 = vperm.xlu0 %744, %v23
  %v746 = vpop.permute.xlu0 %745
  %vm747 = vcmp.eq.s32.totalorder %v743, %v740
  %vm748 = vcmp.eq.s32.totalorder %v746, %v740
  %v749 = vsel %vm747, 1, 0
  %v750 = vsel %vm748, 1, 0
  %v751 = vcvt.s32.f32 %v749
  %v752 = vcvt.s32.f32 %v750
  %v753 = vld [vmem:[%s3] sm:$0x1]
  %v754 = vld [vmem:[%s3 + $0x1] sm:$0x1]
  %v755 = vmul.f32 %v24, %v24
  %v756 = vmul.f32 %v25, %v25
  %757 = vadd.xlane.f32.xlu0 %v755
  %v758 = vpop.xlane.xlu0 %757
  %759 = vadd.xlane.f32.xlu0 %v756
  %v760 = vpop.xlane.xlu0 %759
  %v761 = vmul.f32 %v730, 2.0
  %v762 = vmul.f32 %v736, 2.0
  %v763 = vlaneseq
  %v764 = vshrl.u32 %v763, 7
  %v765 = vsub.s32 0, %v764
  %v766 = vrot.slane %v753, %v765
  %v767 = vsub.f32 %v766, %v761
  %v768 = vsub.f32 %v766, %v762
  %v769 = vmul.f32 %v751, %v767
  %v770 = vmul.f32 %v752, %v768
  %771 = vadd.xlane.f32.xlu0 %v769
  %v772 = vpop.xlane.xlu0 %771
  %773 = vadd.xlane.f32.xlu0 %v770
  %v774 = vpop.xlane.xlu0 %773
  %v775 = vadd.f32 %v758, %v772
  %v776 = vadd.f32 %v760, %v774
  %v777 = vlaneseq
  %v778 = vshrl.u32 %v777, 7
  %v779 = vsub.s32 0, %v778
  %v780 = vrot.slane %v754, %v779
  %v781 = vmul.f32 %v751, %v780
  %v782 = vmul.f32 %v752, %v780
  %783 = vadd.xlane.f32.xlu0 %v781
  %v784 = vpop.xlane.xlu0 %783
  %785 = vadd.xlane.f32.xlu0 %v782
  %v786 = vpop.xlane.xlu0 %785
  %v787 = vmax.f32 %v775, 1e-08
  %v788 = vmax.f32 %v776, 1e-08
  %v789 = vmin.f32 %v787, 1e+08
  %v790 = vmin.f32 %v788, 1e+08
  %v791 = vsel %vm37, %v789, 0.0
  %v792 = vsel %vm38, %v790, 0.0
  %v793 = vmul.f32 %v775, %v784
  %v794 = vmul.f32 %v776, %v786
  %v795 = vmax.f32 %v793, 1e-08
  %v796 = vmax.f32 %v794, 1e-08
  %v797 = vmin.f32 %v795, 1e+08
  %v798 = vmin.f32 %v796, 1e+08
  %v799 = vsel %vm37, %v797, 0.0
  %v800 = vsel %vm38, %v798, 0.0
  %v801 = vsel %vm37, 1.0, 0.0
  %v802 = vsel %vm38, 1.0, 0.0
  %vm803 = vcmask 7168
  %v804 = vsel %vm803, %v791, 0.0
  %v805 = vsel %vm803, %v792, 0.0
  %v806 = vadd.f32 %v804, %v805
  %807 = vadd.xlane.f32.xlu0 %v806
  %v808 = vpop.xlane.xlu0 %807
  %v809 = vrot.slane %v808, 4
  %v810 = vadd.f32 %v808, %v809
  %v811 = vrot.slane %v810, 2
  %v812 = vadd.f32 %v810, %v811
  %v813 = vrot.slane %v812, 1
  %v814 = vadd.f32 %v812, %v813
  %s815 = vtos %v814
  %v816 = vsel %vm803, %v799, 0.0
  %v817 = vsel %vm803, %v800, 0.0
  %v818 = vadd.f32 %v816, %v817
  %819 = vadd.xlane.f32.xlu0 %v818
  %v820 = vpop.xlane.xlu0 %819
  %v821 = vrot.slane %v820, 4
  %v822 = vadd.f32 %v820, %v821
  %v823 = vrot.slane %v822, 2
  %v824 = vadd.f32 %v822, %v823
  %v825 = vrot.slane %v824, 1
  %v826 = vadd.f32 %v824, %v825
  %s827 = vtos %v826
  %v828 = vsel %vm803, %v801, 0.0
  %v829 = vsel %vm803, %v802, 0.0
  %v830 = vadd.f32 %v828, %v829
  %831 = vadd.xlane.f32.xlu0 %v830
  %v832 = vpop.xlane.xlu0 %831
  %v833 = vrot.slane %v832, 4
  %v834 = vadd.f32 %v832, %v833
  %v835 = vrot.slane %v834, 2
  %v836 = vadd.f32 %v834, %v835
  %v837 = vrot.slane %v836, 1
  %v838 = vadd.f32 %v836, %v837
  %s839 = vtos %v838
  %vm840 = vcmp.eq.s32.totalorder %v28, 0
  %vm841 = vcmp.eq.s32.totalorder %v740, 0
  %vm842 = vmand %vm840, %vm841
  %v843 = vstv %s815
  %v844 = vsel %vm842, %v843, 0.0
  %vm845 = vcmp.eq.s32.totalorder %v740, 1
  %vm846 = vmand %vm840, %vm845
  %v847 = vstv %s827
  %v848 = vsel %vm846, %v847, 0.0
  %v849 = vadd.f32 %v844, %v848
  %vm850 = vcmp.eq.s32.totalorder %v28, 1
  %vm851 = vcmp.lt.s32.totalorder %v740, 2
  %vm852 = vmand %vm850, %vm851
  %v853 = vstv %s839
  %v854 = vsel %vm852, %v853, 0.0
  %v855 = vadd.f32 %v849, %v854
  %v856 = vld [vmem:[%s4] sm:$0xff]
  %v857 = vadd.f32 %v856, %v855
  %858 = vst [vmem:[%s4] sm:$0xff] %v857
  // Predicated region
  $region22: #{center_loss_forward.1} parent=0 // pred_check
    %p859 = pneg %p17
  $region23: #{center_loss_forward.1} parent=0 // pred_check_branch
    %861 = sbr.rel (%p859) target = $region25
  $region24: #{center_loss_forward.1} parent=0 // pred_region
    %v862 = vld [vmem:[%s4] sm:$0xff]
    %vm863 = vcmp.gt.f32.partialorder %v862, 0.0
    %v865 = vrot.slane %v862, 1
    %v867 = vrcp.pop %v865
    %v868 = vmul.f32 %v862, %v867
    %v870 = vrot.slane %v868, 7
    %v872 = vsel %vm863, %v870, 0.0
    %v873 = vlaneseq
    %v874 = vshrl.u32 %v873, 7
    %v875 = vsub.s32 1, %v874
    %v876 = vrot.slane %v872, %v875
    %v877 = vsel %vm840, %v876, 0.0
    %878 = vst [vmem:[%s4] sm:$0xff] %v877
  $region25: #{center_loss_forward.1} parent=0 // pred_fallthru
    _
  // Predicated region
  $region26: #{center_loss_forward.1} parent=0 // pred_check
    _
  $region27: #{center_loss_forward.1} parent=0 // pred_check_branch
    %880 = sbr.rel (0) target = $region29
  $region28: #{center_loss_forward.1} parent=0 // pred_region
    _
  $region29: #{center_loss_forward.1} parent=0 // pred_fallthru
    _
  // Predicated region
  $region30: #{center_loss_forward.1} parent=0 // pred_check
    _
  $region31: #{center_loss_forward.1} parent=0 // pred_check_branch
    %882 = sbr.rel (0) target = $region33
  $region32: #{center_loss_forward.1} parent=0 // pred_region
    _
  $region33: #{center_loss_forward.1} parent=0 // pred_fallthru
    _

</llo_original>
